<compile_context>
chip_gen: v6e
topology: v6e:2x2x1
jax: 0.10.0
libtpu: 0.0.40
codegen_flags: <defaults>
</compile_context>

<pallas_src>
import functools

import jax
import jax.numpy as jnp
from jax.experimental import pallas as pl
from jax.experimental.pallas import tpu as pltpu


# --------------------------------------------------------- packed param layout
def _param_layout(fin, hidden):
    """Row offsets inside the single packed (rows, hidden+2) f32 buffer."""
    def align8(r):
        return (r + 7) & ~7
    w1_r0 = 0                       # w1_aug : (fin, hidden+2)
    w2_r0 = align8(fin)             # w2_aug : (hidden, hidden+2)
    wl_r0 = w2_r0 + hidden          # wl     : (hidden, hidden)   (cols 0:hidden)
    vec_r0 = wl_r0 + hidden         # rows: bn1_s, bn1_t, bn2_s, bn2_t, bl
    n_rows = align8(vec_r0 + 5)
    n_cols = hidden + 2
    return w1_r0, w2_r0, wl_r0, vec_r0, n_rows, n_cols


# ------------------------------------------------------------------ kernel ---
def _fused_gat_kernel(x_ref, adj_ref, prm_ref, out_ref, *, fin, hidden):
    w1_r0, w2_r0, wl_r0, vec_r0, _, _ = _param_layout(fin, hidden)

    x = x_ref[...]                      # (N, Fin)
    adj = adj_ref[...]                  # (N, N)   adj[dst, src] in {0,1}

    # Hoisted once, shared by both GAT layers.
    neg_mask = jnp.where(adj > 0, 0.0, jnp.float32(-1e30))      # (N, N)
    deg = jnp.sum(adj, axis=1, keepdims=True)                   # (N, 1) in-degree (>=1, self loops)

    # Static ref-slices of the single packed parameter buffer.
    w1_aug = prm_ref[w1_r0:w1_r0 + fin, :]                       # (Fin, H+2)
    w2_aug = prm_ref[w2_r0:w2_r0 + hidden, :]                    # (H,   H+2)
    wl     = prm_ref[wl_r0:wl_r0 + hidden, :hidden]              # (H, H)
    bn1_s  = prm_ref[vec_r0 + 0:vec_r0 + 1, :hidden]             # (1, H)
    bn1_t  = prm_ref[vec_r0 + 1:vec_r0 + 2, :hidden]
    bn2_s  = prm_ref[vec_r0 + 2:vec_r0 + 3, :hidden]
    bn2_t  = prm_ref[vec_r0 + 3:vec_r0 + 4, :hidden]
    bl     = prm_ref[vec_r0 + 4:vec_r0 + 5, :hidden]

    def gat_bn_relu(h_in, w_aug, bn_s, bn_t):
        # Single augmented matmul: features + both attention projections.
        h_aug = jnp.dot(h_in.astype(jnp.bfloat16), w_aug.astype(jnp.bfloat16),
                        preferred_element_type=jnp.float32)      # (N, H+2)
        h = h_aug[:, :hidden]                                    # (N, H)
        a_src = h_aug[:, hidden:hidden + 1]                      # (N, 1)
        a_dst = h_aug[:, hidden + 1:hidden + 2]                  # (N, 1)

        e = a_dst + a_src.T                                      # (N, N) e[i,j]
        e = jnp.where(e > 0, e, 0.2 * e)                         # LeakyReLU(0.2)
        e = e + neg_mask                                         # mask non-edges
        e = e - jnp.max(e, axis=1, keepdims=True)                # stable softmax
        p = jnp.exp(e)                                           # masked entries -> exactly 0
        denom = jnp.sum(p, axis=1, keepdims=True)                # (N, 1), >= 1

        # softmax normalization and aggr='mean' folded into one EUP reciprocal,
        # applied to the (N, H) aggregate instead of an (N, N) divide.
        scale = pl.reciprocal(denom * deg, approx=True)          # (N, 1)
        agg = jnp.dot(p.astype(jnp.bfloat16), h.astype(jnp.bfloat16),
                      preferred_element_type=jnp.float32)        # (N, H)
        # eval-mode BatchNorm affine (GAT bias already folded into bn_t) + ReLU
        return jnp.maximum(agg * scale * bn_s + bn_t, 0.0)

    h = gat_bn_relu(x, w1_aug, bn1_s, bn1_t)
    # TODO(synk): F.dropout is identity in eval mode (training=False) — omitted.
    h = gat_bn_relu(h, w2_aug, bn2_s, bn2_t)

    y = jnp.dot(h.astype(jnp.bfloat16), wl.astype(jnp.bfloat16),
                preferred_element_type=jnp.float32) + bl
    out_ref[...] = jnp.maximum(y, 0.0)


# ----------------------------------------------------------------- wrapper ---
@jax.jit
def conductivity_gat_forward(x, adj, packed_params):
    n, fin = x.shape
    hidden = packed_params.shape[1] - 2
    kernel = functools.partial(_fused_gat_kernel, fin=fin, hidden=hidden)
    return pl.pallas_call(
        kernel,
        out_shape=jax.ShapeDtypeStruct((n, hidden), jnp.float32),
        grid_spec=pltpu.PrefetchScalarGridSpec(
            num_scalar_prefetch=0,
            grid=(1,),
            in_specs=[pl.BlockSpec(x.shape, lambda i: (0, 0)),
                      pl.BlockSpec(adj.shape, lambda i: (0, 0)),
                      pl.BlockSpec(packed_params.shape, lambda i: (0, 0))],
            out_specs=pl.BlockSpec((n, hidden), lambda i: (0, 0)),
        ),
        compiler_params=pltpu.CompilerParams(
            dimension_semantics=("arbitrary",),
        ),
    )(x, adj, packed_params)


# -------------------------------------------------- one-time parameter fold ---
def prepare_packed_params(params, fin, hidden):
    """Fold att into W, fold eval-BN + GAT bias, pack everything in one buffer."""
    w1_r0, w2_r0, wl_r0, vec_r0, n_rows, n_cols = _param_layout(fin, hidden)

    def fold_layer(w, att, bias, bn):
        # att cols: [att_src, att_dst];  bn rows: [gamma, beta, running_mean, running_var]
        w_aug = jnp.concatenate([w, w @ att], axis=1)            # (fin_l, H+2)
        gamma, beta, mean, var = bn[0], bn[1], bn[2], bn[3]
        s = gamma * jax.lax.rsqrt(var + 1e-5)
        t = (bias - mean) * s + beta                             # GAT bias folded in
        return w_aug, s, t

    w1_aug, s1, t1 = fold_layer(params["w1"], params["att1"], params["b1"], params["bn1"])
    w2_aug, s2, t2 = fold_layer(params["w2"], params["att2"], params["b2"], params["bn2"])

    buf = jnp.zeros((n_rows, n_cols), jnp.float32)
    buf = buf.at[w1_r0:w1_r0 + fin, :].set(w1_aug)
    buf = buf.at[w2_r0:w2_r0 + hidden, :].set(w2_aug)
    buf = buf.at[wl_r0:wl_r0 + hidden, :hidden].set(params["wl"])
    buf = buf.at[vec_r0 + 0, :hidden].set(s1)
    buf = buf.at[vec_r0 + 1, :hidden].set(t1)
    buf = buf.at[vec_r0 + 2, :hidden].set(s2)
    buf = buf.at[vec_r0 + 3, :hidden].set(t2)
    buf = buf.at[vec_r0 + 4, :hidden].set(params["bl"])
    return buf


# ------------------------------------------------------------------- setup ---
def make_params(key, in_dim, hidden):
    def glorot(k, shape):
        fan_in, fan_out = shape[0], shape[-1]
        lim = (6.0 / (fan_in + fan_out)) ** 0.5
        return jax.random.uniform(k, shape, jnp.float32, -lim, lim)

    ks = jax.random.split(key, 12)
    return {
        "w1":   glorot(ks[0], (in_dim, hidden)),
        "att1": glorot(ks[1], (hidden, 2)),            # col0 = att_src, col1 = att_dst
        "b1":   jnp.zeros((hidden,), jnp.float32),
        # BatchNorm packed rows: [gamma, beta, running_mean, running_var]
        "bn1":  jnp.stack([jnp.full((hidden,), 1.1, jnp.float32),
                           jnp.full((hidden,), 0.05, jnp.float32),
                           jax.random.normal(ks[2], (hidden,)) * 0.1,
                           jnp.full((hidden,), 0.9, jnp.float32)], axis=0),
        "w2":   glorot(ks[3], (hidden, hidden)),
        "att2": glorot(ks[4], (hidden, 2)),
        "b2":   jnp.zeros((hidden,), jnp.float32),
        "bn2":  jnp.stack([jnp.full((hidden,), 0.95, jnp.float32),
                           jnp.full((hidden,), -0.02, jnp.float32),
                           jax.random.normal(ks[5], (hidden,)) * 0.1,
                           jnp.full((hidden,), 1.05, jnp.float32)], axis=0),
        "wl":   glorot(ks[6], (hidden, hidden)),
        "bl":   (jax.random.normal(ks[7], (hidden,)) * 0.01).astype(jnp.float32),
    }


def build_graph(key, n_nodes):
    # ring graph (both directions) + a few random chords + self loops
    src, dst = [], []
    for i in range(n_nodes):
        src += [i, (i + 1) % n_nodes]
        dst += [(i + 1) % n_nodes, i]
    extra = jax.random.randint(key, (2, 2 * n_nodes), 0, n_nodes)
    src = jnp.concatenate([jnp.array(src, jnp.int32), extra[0]])
    dst = jnp.concatenate([jnp.array(dst, jnp.int32), extra[1]])
    loops = jnp.arange(n_nodes, dtype=jnp.int32)   # PyG GATConv add_self_loops=True
    src = jnp.concatenate([src, loops])
    dst = jnp.concatenate([dst, loops])
    adj = jnp.zeros((n_nodes, n_nodes), jnp.float32).at[dst, src].set(1.0)
    return adj


# --------------------------------------------------------------------- main ---
if __name__ == "__main__":
    N_NODES = 64     # number of graph nodes
    IN_DIM = 2       # data.x has 2 features (GATConv(2, hidden))
    HIDDEN = 32      # small hidden_channels

    root = jax.random.PRNGKey(0)
    k_x, k_graph, k_params = jax.random.split(root, 3)

    x = jax.random.normal(k_x, (N_NODES, IN_DIM), jnp.float32)
    adj = build_graph(k_graph, N_NODES)
    params = make_params(k_params, IN_DIM, HIDDEN)
    packed = prepare_packed_params(params, IN_DIM, HIDDEN)   # one-time fold + pack

    out = conductivity_gat_forward(x, adj, packed)
    out = jax.block_until_ready(out)
    assert out.shape == (N_NODES, HIDDEN)
    assert bool(jnp.all(jnp.isfinite(out)))
    print("KERNEL_OK")
</pallas_src>

<mosaic_0001>
module attributes {stable_mosaic.version = 11 : i64} {
  func.func @_fused_gat_kernel(%arg0: i32, %arg1: memref<64x2xf32, #tpu.memory_space<vmem>>, %arg2: memref<64x64xf32, #tpu.memory_space<vmem>>, %arg3: memref<80x34xf32, #tpu.memory_space<vmem>>, %arg4: memref<64x32xf32, #tpu.memory_space<vmem>>) attributes {dimension_semantics = [#tpu.dimension_semantics<arbitrary>], iteration_bounds = array<i64: 1>, scalar_prefetch = 0 : i64, scratch_operands = 0 : i64, tpu.core_type = #tpu.core_type<tc>, window_params = [{pipeline_mode = #tpu.pipeline_mode<synchronous>, transform_indices = @transform_0, window_bounds = array<i64: 64, 2>}, {pipeline_mode = #tpu.pipeline_mode<synchronous>, transform_indices = @transform_1, window_bounds = array<i64: 64, 64>}, {pipeline_mode = #tpu.pipeline_mode<synchronous>, transform_indices = @transform_2, window_bounds = array<i64: 80, 34>}, {pipeline_mode = #tpu.pipeline_mode<synchronous>, transform_indices = @transform_3, window_bounds = array<i64: 64, 32>}]} {
    %c0 = arith.constant 0 : index
    %c0_0 = arith.constant 0 : index
    %0 = vector.load %arg1[%c0, %c0_0] : memref<64x2xf32, #tpu.memory_space<vmem>>, vector<64x2xf32>
    %c0_1 = arith.constant 0 : index
    %c0_2 = arith.constant 0 : index
    %1 = vector.load %arg2[%c0_1, %c0_2] : memref<64x64xf32, #tpu.memory_space<vmem>>, vector<64x64xf32>
    %cst = arith.constant 0.000000e+00 : f32
    %2 = vector.broadcast %cst : f32 to vector<64x64xf32>
    %3 = arith.cmpf ogt, %1, %2 : vector<64x64xf32>
    %cst_3 = arith.constant 0.000000e+00 : f32
    %cst_4 = arith.constant -1.000000e+30 : f32
    %4 = vector.broadcast %cst_3 : f32 to vector<64x64xf32>
    %5 = vector.broadcast %cst_4 : f32 to vector<64x64xf32>
    %6 = arith.select %3, %4, %5 : vector<64x64xi1>, vector<64x64xf32>
    %cst_5 = arith.constant dense<0.000000e+00> : vector<64xf32>
    %7 = vector.multi_reduction <add>, %1, %cst_5 [1] : vector<64x64xf32> to vector<64xf32>
    %8 = vector.shape_cast %7 : vector<64xf32> to vector<64x1xf32>
    %c0_6 = arith.constant 0 : index
    %c0_7 = arith.constant 0 : index
    %9 = vector.load %arg3[%c0_6, %c0_7] : memref<80x34xf32, #tpu.memory_space<vmem>>, vector<2x34xf32>
    %c8 = arith.constant 8 : index
    %c0_8 = arith.constant 0 : index
    %10 = vector.load %arg3[%c8, %c0_8] : memref<80x34xf32, #tpu.memory_space<vmem>>, vector<32x34xf32>
    %c40 = arith.constant 40 : index
    %c0_9 = arith.constant 0 : index
    %11 = vector.load %arg3[%c40, %c0_9] : memref<80x34xf32, #tpu.memory_space<vmem>>, vector<32x32xf32>
    %c72 = arith.constant 72 : index
    %c0_10 = arith.constant 0 : index
    %12 = vector.load %arg3[%c72, %c0_10] : memref<80x34xf32, #tpu.memory_space<vmem>>, vector<1x32xf32>
    %c73 = arith.constant 73 : index
    %c0_11 = arith.constant 0 : index
    %13 = vector.load %arg3[%c73, %c0_11] : memref<80x34xf32, #tpu.memory_space<vmem>>, vector<1x32xf32>
    %c74 = arith.constant 74 : index
    %c0_12 = arith.constant 0 : index
    %14 = vector.load %arg3[%c74, %c0_12] : memref<80x34xf32, #tpu.memory_space<vmem>>, vector<1x32xf32>
    %c75 = arith.constant 75 : index
    %c0_13 = arith.constant 0 : index
    %15 = vector.load %arg3[%c75, %c0_13] : memref<80x34xf32, #tpu.memory_space<vmem>>, vector<1x32xf32>
    %c76 = arith.constant 76 : index
    %c0_14 = arith.constant 0 : index
    %16 = vector.load %arg3[%c76, %c0_14] : memref<80x34xf32, #tpu.memory_space<vmem>>, vector<1x32xf32>
    %17 = arith.truncf %0 : vector<64x2xf32> to vector<64x2xbf16>
    %18 = arith.truncf %9 : vector<2x34xf32> to vector<2x34xbf16>
    %cst_15 = arith.constant dense<0.000000e+00> : vector<64x34xf32>
    %19 = tpu.matmul %17, %18, %cst_15 {dimension_numbers = #tpu.dot_dimension_numbers<[1], [0], [0], [1], [0, 0, 1, 1], [], []>} : vector<64x2xbf16>, vector<2x34xbf16>, vector<64x34xf32> -> vector<64x34xf32>
    %20 = vector.extract_strided_slice %19 {offsets = [0, 0], sizes = [64, 32], strides = [1, 1]} : vector<64x34xf32> to vector<64x32xf32>
    %21 = vector.extract_strided_slice %19 {offsets = [0, 32], sizes = [64, 1], strides = [1, 1]} : vector<64x34xf32> to vector<64x1xf32>
    %22 = vector.extract_strided_slice %19 {offsets = [0, 33], sizes = [64, 1], strides = [1, 1]} : vector<64x34xf32> to vector<64x1xf32>
    %23 = tpu.transpose %21, [1, 0] : vector<64x1xf32> -> vector<1x64xf32>
    %24 = vector.broadcast %22 : vector<64x1xf32> to vector<64x64xf32>
    %25 = vector.broadcast %23 : vector<1x64xf32> to vector<64x64xf32>
    %26 = arith.addf %24, %25 : vector<64x64xf32>
    %cst_16 = arith.constant 0.000000e+00 : f32
    %27 = vector.broadcast %cst_16 : f32 to vector<64x64xf32>
    %28 = arith.cmpf ogt, %26, %27 : vector<64x64xf32>
    %cst_17 = arith.constant 2.000000e-01 : f32
    %29 = vector.broadcast %cst_17 : f32 to vector<64x64xf32>
    %30 = arith.mulf %29, %26 : vector<64x64xf32>
    %31 = arith.select %28, %26, %30 : vector<64x64xi1>, vector<64x64xf32>
    %32 = arith.addf %31, %6 : vector<64x64xf32>
    %cst_18 = arith.constant dense<0xFF800000> : vector<64xf32>
    %33 = vector.multi_reduction <maximumf>, %32, %cst_18 [1] : vector<64x64xf32> to vector<64xf32>
    %34 = vector.shape_cast %33 : vector<64xf32> to vector<64x1xf32>
    %35 = vector.broadcast %34 : vector<64x1xf32> to vector<64x64xf32>
    %36 = arith.subf %32, %35 : vector<64x64xf32>
    %37 = math.exp %36 : vector<64x64xf32>
    %cst_19 = arith.constant dense<0.000000e+00> : vector<64xf32>
    %38 = vector.multi_reduction <add>, %37, %cst_19 [1] : vector<64x64xf32> to vector<64xf32>
    %39 = vector.shape_cast %38 : vector<64xf32> to vector<64x1xf32>
    %40 = arith.mulf %39, %8 : vector<64x1xf32>
    %41 = tpu.reciprocal %40 {approx = true} : vector<64x1xf32> -> vector<64x1xf32>
    %42 = arith.truncf %37 : vector<64x64xf32> to vector<64x64xbf16>
    %43 = arith.truncf %20 : vector<64x32xf32> to vector<64x32xbf16>
    %cst_20 = arith.constant dense<0.000000e+00> : vector<64x32xf32>
    %44 = tpu.matmul %42, %43, %cst_20 {dimension_numbers = #tpu.dot_dimension_numbers<[1], [0], [0], [1], [0, 0, 1, 1], [], []>} : vector<64x64xbf16>, vector<64x32xbf16>, vector<64x32xf32> -> vector<64x32xf32>
    %45 = vector.broadcast %41 : vector<64x1xf32> to vector<64x32xf32>
    %46 = arith.mulf %44, %45 : vector<64x32xf32>
    %47 = vector.broadcast %12 : vector<1x32xf32> to vector<64x32xf32>
    %48 = arith.mulf %46, %47 : vector<64x32xf32>
    %49 = vector.broadcast %13 : vector<1x32xf32> to vector<64x32xf32>
    %50 = arith.addf %48, %49 : vector<64x32xf32>
    %cst_21 = arith.constant 0.000000e+00 : f32
    %51 = vector.broadcast %cst_21 : f32 to vector<64x32xf32>
    %52 = arith.maximumf %50, %51 : vector<64x32xf32>
    %53 = arith.truncf %52 : vector<64x32xf32> to vector<64x32xbf16>
    %54 = arith.truncf %10 : vector<32x34xf32> to vector<32x34xbf16>
    %cst_22 = arith.constant dense<0.000000e+00> : vector<64x34xf32>
    %55 = tpu.matmul %53, %54, %cst_22 {dimension_numbers = #tpu.dot_dimension_numbers<[1], [0], [0], [1], [0, 0, 1, 1], [], []>} : vector<64x32xbf16>, vector<32x34xbf16>, vector<64x34xf32> -> vector<64x34xf32>
    %56 = vector.extract_strided_slice %55 {offsets = [0, 0], sizes = [64, 32], strides = [1, 1]} : vector<64x34xf32> to vector<64x32xf32>
    %57 = vector.extract_strided_slice %55 {offsets = [0, 32], sizes = [64, 1], strides = [1, 1]} : vector<64x34xf32> to vector<64x1xf32>
    %58 = vector.extract_strided_slice %55 {offsets = [0, 33], sizes = [64, 1], strides = [1, 1]} : vector<64x34xf32> to vector<64x1xf32>
    %59 = tpu.transpose %57, [1, 0] : vector<64x1xf32> -> vector<1x64xf32>
    %60 = vector.broadcast %58 : vector<64x1xf32> to vector<64x64xf32>
    %61 = vector.broadcast %59 : vector<1x64xf32> to vector<64x64xf32>
    %62 = arith.addf %60, %61 : vector<64x64xf32>
    %cst_23 = arith.constant 0.000000e+00 : f32
    %63 = vector.broadcast %cst_23 : f32 to vector<64x64xf32>
    %64 = arith.cmpf ogt, %62, %63 : vector<64x64xf32>
    %cst_24 = arith.constant 2.000000e-01 : f32
    %65 = vector.broadcast %cst_24 : f32 to vector<64x64xf32>
    %66 = arith.mulf %65, %62 : vector<64x64xf32>
    %67 = arith.select %64, %62, %66 : vector<64x64xi1>, vector<64x64xf32>
    %68 = arith.addf %67, %6 : vector<64x64xf32>
    %cst_25 = arith.constant dense<0xFF800000> : vector<64xf32>
    %69 = vector.multi_reduction <maximumf>, %68, %cst_25 [1] : vector<64x64xf32> to vector<64xf32>
    %70 = vector.shape_cast %69 : vector<64xf32> to vector<64x1xf32>
    %71 = vector.broadcast %70 : vector<64x1xf32> to vector<64x64xf32>
    %72 = arith.subf %68, %71 : vector<64x64xf32>
    %73 = math.exp %72 : vector<64x64xf32>
    %cst_26 = arith.constant dense<0.000000e+00> : vector<64xf32>
    %74 = vector.multi_reduction <add>, %73, %cst_26 [1] : vector<64x64xf32> to vector<64xf32>
    %75 = vector.shape_cast %74 : vector<64xf32> to vector<64x1xf32>
    %76 = arith.mulf %75, %8 : vector<64x1xf32>
    %77 = tpu.reciprocal %76 {approx = true} : vector<64x1xf32> -> vector<64x1xf32>
    %78 = arith.truncf %73 : vector<64x64xf32> to vector<64x64xbf16>
    %79 = arith.truncf %56 : vector<64x32xf32> to vector<64x32xbf16>
    %cst_27 = arith.constant dense<0.000000e+00> : vector<64x32xf32>
    %80 = tpu.matmul %78, %79, %cst_27 {dimension_numbers = #tpu.dot_dimension_numbers<[1], [0], [0], [1], [0, 0, 1, 1], [], []>} : vector<64x64xbf16>, vector<64x32xbf16>, vector<64x32xf32> -> vector<64x32xf32>
    %81 = vector.broadcast %77 : vector<64x1xf32> to vector<64x32xf32>
    %82 = arith.mulf %80, %81 : vector<64x32xf32>
    %83 = vector.broadcast %14 : vector<1x32xf32> to vector<64x32xf32>
    %84 = arith.mulf %82, %83 : vector<64x32xf32>
    %85 = vector.broadcast %15 : vector<1x32xf32> to vector<64x32xf32>
    %86 = arith.addf %84, %85 : vector<64x32xf32>
    %cst_28 = arith.constant 0.000000e+00 : f32
    %87 = vector.broadcast %cst_28 : f32 to vector<64x32xf32>
    %88 = arith.maximumf %86, %87 : vector<64x32xf32>
    %89 = arith.truncf %88 : vector<64x32xf32> to vector<64x32xbf16>
    %90 = arith.truncf %11 : vector<32x32xf32> to vector<32x32xbf16>
    %cst_29 = arith.constant dense<0.000000e+00> : vector<64x32xf32>
    %91 = tpu.matmul %89, %90, %cst_29 {dimension_numbers = #tpu.dot_dimension_numbers<[1], [0], [0], [1], [0, 0, 1, 1], [], []>} : vector<64x32xbf16>, vector<32x32xbf16>, vector<64x32xf32> -> vector<64x32xf32>
    %92 = vector.broadcast %16 : vector<1x32xf32> to vector<64x32xf32>
    %93 = arith.addf %91, %92 : vector<64x32xf32>
    %cst_30 = arith.constant 0.000000e+00 : f32
    %94 = vector.broadcast %cst_30 : f32 to vector<64x32xf32>
    %95 = arith.maximumf %93, %94 : vector<64x32xf32>
    %c0_31 = arith.constant 0 : index
    %c0_32 = arith.constant 0 : index
    %96 = vector.load %arg4[%c0_31, %c0_32] : memref<64x32xf32, #tpu.memory_space<vmem>>, vector<64x32xf32>
    tpu.vector_store %arg4[%c0_31, %c0_32], %95 {strides = array<i32>} : memref<64x32xf32, #tpu.memory_space<vmem>>, vector<64x32xf32>,
    return
  }
  func.func @transform_0(%arg0: i32) -> (i32, i32) {
    %c0_i32 = arith.constant 0 : i32
    %c0_i32_0 = arith.constant 0 : i32
    %c0_i32_1 = arith.constant 0 : i32
    return %c0_i32, %c0_i32_0 : i32, i32
  }
  func.func @transform_1(%arg0: i32) -> (i32, i32) {
    %c0_i32 = arith.constant 0 : i32
    %c0_i32_0 = arith.constant 0 : i32
    %c0_i32_1 = arith.constant 0 : i32
    return %c0_i32, %c0_i32_0 : i32, i32
  }
  func.func @transform_2(%arg0: i32) -> (i32, i32) {
    %c0_i32 = arith.constant 0 : i32
    %c0_i32_0 = arith.constant 0 : i32
    %c0_i32_1 = arith.constant 0 : i32
    return %c0_i32, %c0_i32_0 : i32, i32
  }
  func.func @transform_3(%arg0: i32) -> (i32, i32) {
    %c0_i32 = arith.constant 0 : i32
    %c0_i32_0 = arith.constant 0 : i32
    %c0_i32_1 = arith.constant 0 : i32
    return %c0_i32, %c0_i32_0 : i32, i32
  }
}

</mosaic_0001>

<llo_original>
// kernel: conductivity_gat_forward.1
$region0: #{conductivity_gat_forward.1}
  #allocation0 [shape = 'u32[]', space=smem, size = 0x4, offset = 0x4, fixed_abs, tag = 'smem constant byte address 0x4 - core index']
  #allocation1 [shape = 'u32[144,128]{1,0:T(1,128)}', space=vmem, size = 0x12000, scoped, tag = 'internal scratch']
  %s0 = inlined_call_operand.vmem [shape: f32[64,2], index: 0, kind: input, shape index: {}]
  %s1 = inlined_call_operand.vmem [shape: f32[64,64], index: 1, kind: input, shape index: {}]
  %s2 = inlined_call_operand.vmem [shape: f32[80,34], index: 2, kind: input, shape index: {}]
  %s3 = inlined_call_operand.vmem [shape: f32[64,32], index: 3, kind: output, shape index: {}]
  %s4 = sld [smem:[#allocation0]]
  $region22: #{conductivity_gat_forward.1} parent=0
    _
  %s6 = ssub.s32 1, %s4
  %s7 = scalar_select 0, %s6, %s4
  // Predicated region
  $region2: #{conductivity_gat_forward.1} parent=0 // pred_check
    _
  $region3: #{conductivity_gat_forward.1} parent=0 // pred_check_branch
    %9 = sbr.rel (0) target = $region5
  $region4: #{conductivity_gat_forward.1} parent=0 // pred_region
    _
  $region5: #{conductivity_gat_forward.1} parent=0 // pred_fallthru
    _
  // Predicated region
  $region6: #{conductivity_gat_forward.1} parent=0 // pred_check
    _
  $region7: #{conductivity_gat_forward.1} parent=0 // pred_check_branch
    %11 = sbr.rel (0) target = $region9
  $region8: #{conductivity_gat_forward.1} parent=0 // pred_region
    _
  $region9: #{conductivity_gat_forward.1} parent=0 // pred_fallthru
    _
  // Predicated region
  $region10: #{conductivity_gat_forward.1} parent=0 // pred_check
    _
  $region11: #{conductivity_gat_forward.1} parent=0 // pred_check_branch
    %13 = sbr.rel (0) target = $region13
  $region12: #{conductivity_gat_forward.1} parent=0 // pred_region
    _
  $region13: #{conductivity_gat_forward.1} parent=0 // pred_fallthru
    _
  %v15 = vld [vmem:[%s0] sm:$0xff]
  %v16 = vld [vmem:[%s0 + $0x8] sm:$0xff]
  %v17 = vld [vmem:[%s0 + $0x10] sm:$0xff]
  %v18 = vld [vmem:[%s0 + $0x18] sm:$0xff]
  %v19 = vld [vmem:[%s0 + $0x20] sm:$0xff]
  %v20 = vld [vmem:[%s0 + $0x28] sm:$0xff]
  %v21 = vld [vmem:[%s0 + $0x30] sm:$0xff]
  %v22 = vld [vmem:[%s0 + $0x38] sm:$0xff]
  %v23 = vld [vmem:[%s1] sm:$0xff]
  %v24 = vld [vmem:[%s1 + $0x8] sm:$0xff]
  %v25 = vld [vmem:[%s1 + $0x10] sm:$0xff]
  %v26 = vld [vmem:[%s1 + $0x18] sm:$0xff]
  %v27 = vld [vmem:[%s1 + $0x20] sm:$0xff]
  %v28 = vld [vmem:[%s1 + $0x28] sm:$0xff]
  %v29 = vld [vmem:[%s1 + $0x30] sm:$0xff]
  %v30 = vld [vmem:[%s1 + $0x38] sm:$0xff]
  %vm31 = vcmp.gt.f32.partialorder %v23, 0.0
  %vm32 = vcmp.gt.f32.partialorder %v24, 0.0
  %vm33 = vcmp.gt.f32.partialorder %v25, 0.0
  %vm34 = vcmp.gt.f32.partialorder %v26, 0.0
  %vm35 = vcmp.gt.f32.partialorder %v27, 0.0
  %vm36 = vcmp.gt.f32.partialorder %v28, 0.0
  %vm37 = vcmp.gt.f32.partialorder %v29, 0.0
  %vm38 = vcmp.gt.f32.partialorder %v30, 0.0
  %v39 = vsel %vm31, 0.0, -1e+30
  %v40 = vsel %vm32, 0.0, -1e+30
  %v41 = vsel %vm33, 0.0, -1e+30
  %v42 = vsel %vm34, 0.0, -1e+30
  %v43 = vsel %vm35, 0.0, -1e+30
  %v44 = vsel %vm36, 0.0, -1e+30
  %v45 = vsel %vm37, 0.0, -1e+30
  %v46 = vsel %vm38, 0.0, -1e+30
  %vm47 = vcmask 523264
  %v48 = vsel %vm47, %v23, 0.0
  %49 = vadd.xlane.f32.xlu0 %v48
  %v50 = vpop.xlane.xlu0 %49
  %v51 = vsel %vm47, %v24, 0.0
  %52 = vadd.xlane.f32.xlu0 %v51
  %v53 = vpop.xlane.xlu0 %52
  %v54 = vsel %vm47, %v25, 0.0
  %55 = vadd.xlane.f32.xlu0 %v54
  %v56 = vpop.xlane.xlu0 %55
  %v57 = vsel %vm47, %v26, 0.0
  %58 = vadd.xlane.f32.xlu0 %v57
  %v59 = vpop.xlane.xlu0 %58
  %v60 = vsel %vm47, %v27, 0.0
  %61 = vadd.xlane.f32.xlu0 %v60
  %v62 = vpop.xlane.xlu0 %61
  %v63 = vsel %vm47, %v28, 0.0
  %64 = vadd.xlane.f32.xlu0 %v63
  %v65 = vpop.xlane.xlu0 %64
  %v66 = vsel %vm47, %v29, 0.0
  %67 = vadd.xlane.f32.xlu0 %v66
  %v68 = vpop.xlane.xlu0 %67
  %v69 = vsel %vm47, %v30, 0.0
  %70 = vadd.xlane.f32.xlu0 %v69
  %v71 = vpop.xlane.xlu0 %70
  %v72 = vld [vmem:[%s2] sm:$0x3]
  %v73 = vld [vmem:[%s2 + $0x8] sm:$0xff]
  %v74 = vld [vmem:[%s2 + $0x10] sm:$0xff]
  %v75 = vld [vmem:[%s2 + $0x18] sm:$0xff]
  %v76 = vld [vmem:[%s2 + $0x20] sm:$0xff]
  %v77 = vld [vmem:[%s2 + $0x28] sm:$0xff]
  %v78 = vld [vmem:[%s2 + $0x30] sm:$0xff]
  %v79 = vld [vmem:[%s2 + $0x38] sm:$0xff]
  %v80 = vld [vmem:[%s2 + $0x40] sm:$0xff]
  %v81 = vld [vmem:[%s2 + $0x48] sm:$0x1]
  %v82 = vld [vmem:[%s2 + $0x49] sm:$0x1]
  %v83 = vld [vmem:[%s2 + $0x4a] sm:$0x1]
  %v84 = vld [vmem:[%s2 + $0x4b] sm:$0x1]
  %v85 = vld [vmem:[%s2 + $0x4c] sm:$0x1]
  %v86 = vpack.c.bf16 %v16, %v15
  %v87 = vpack.c.bf16 %v18, %v17
  %v88 = vpack.c.bf16 %v20, %v19
  %v89 = vpack.c.bf16 %v22, %v21
  %v90 = vpack.c.bf16 %v72, %v72
  %vm91 = vcmask 15360
  %v93 = vsel %vm91, %v86, 0
  %v96 = vsel %vm91, %v87, 0
  %v99 = vsel %vm91, %v88, 0
  %v102 = vsel %vm91, %v89, 0
  %vm104 = vcmask 1040384
  %v106 = vsel %vm104, %v90, 0
  %108 = vmatprep.subr.bf16.mxu0 0
  %109 = vmatpush1.bf16.msra.mxu0 0
  %110 = vmatprep.subr.bf16.mxu0 0
  %111 = vmatpush1.bf16.msra.mxu0 0
  %112 = vmatprep.subr.bf16.mxu0 0
  %113 = vmatpush1.bf16.msra.mxu0 0
  %114 = vmatprep.subr.bf16.mxu0 0
  %115 = vmatpush1.bf16.msra.mxu0 0
  %116 = vmatprep.subr.bf16.mxu0 0
  %117 = vmatpush1.bf16.msra.mxu0 0
  %118 = vmatprep.subr.bf16.mxu0 0
  %119 = vmatpush1.bf16.msra.mxu0 0
  %120 = vmatprep.subr.bf16.mxu0 0
  %121 = vmatpush1.bf16.msra.mxu0 0
  %122 = vmatprep.subr.bf16.mxu0 0
  %123 = vmatpush1.bf16.msra.mxu0 %v106
  %124 = vmatprep.subr.bf16.mxu0 0
  %125 = vmatpush2.bf16.msra.mxu0 0
  %126 = vmatprep.subr.bf16.mxu0 0
  %127 = vmatpush2.bf16.msra.mxu0 0
  %128 = vmatprep.subr.bf16.mxu0 0
  %129 = vmatpush2.bf16.msra.mxu0 0
  %130 = vmatprep.subr.bf16.mxu0 0
  %131 = vmatpush2.bf16.msra.mxu0 0
  %132 = vmatprep.subr.bf16.mxu0 0
  %133 = vmatpush2.bf16.msra.mxu0 0
  %134 = vmatprep.subr.bf16.mxu0 0
  %135 = vmatpush2.bf16.msra.mxu0 0
  %136 = vmatprep.subr.bf16.mxu0 0
  %137 = vmatpush2.bf16.msra.mxu0 0
  %138 = vmatprep.subr.bf16.mxu0 0
  %139 = vmatpush2.bf16.msra.mxu0 0
  %140 = vmatprep.mubr.bf16.mxu0 0
  %141 = vmatmul.mubr.bf16.gmra.mxu0 %v93
  %v142 = vpop.f32.mrf.mxu0
  %v143 = vadd.f32 0.0, %v142
  %v144 = vpop.f32.mrf.mxu0
  %v145 = vpop.f32.mrf.mxu0
  %v146 = vadd.f32 0.0, %v145
  %v147 = vpop.f32.mrf.mxu0
  %148 = vmatprep.mubr.bf16.mxu0 0
  %149 = vmatmul.mubr.bf16.gmra.mxu0 %v96
  %v150 = vpop.f32.mrf.mxu0
  %v151 = vadd.f32 0.0, %v150
  %v152 = vpop.f32.mrf.mxu0
  %v153 = vpop.f32.mrf.mxu0
  %v154 = vadd.f32 0.0, %v153
  %v155 = vpop.f32.mrf.mxu0
  %156 = vmatprep.mubr.bf16.mxu0 0
  %157 = vmatmul.mubr.bf16.gmra.mxu0 %v99
  %v158 = vpop.f32.mrf.mxu0
  %v159 = vadd.f32 0.0, %v158
  %v160 = vpop.f32.mrf.mxu0
  %v161 = vpop.f32.mrf.mxu0
  %v162 = vadd.f32 0.0, %v161
  %v163 = vpop.f32.mrf.mxu0
  %164 = vmatprep.mubr.bf16.mxu0 0
  %165 = vmatmul.mubr.bf16.gmra.mxu0 %v102
  %v166 = vpop.f32.mrf.mxu0
  %v167 = vadd.f32 0.0, %v166
  %v168 = vpop.f32.mrf.mxu0
  %v169 = vpop.f32.mrf.mxu0
  %v170 = vadd.f32 0.0, %v169
  %v171 = vpop.f32.mrf.mxu0
  %172 = vdwg.mxu0
  %181 = vrot.lane.b32.xlu0 %v143, 96
  %v182 = vpop.permute.xlu0 %181
  %183 = vrot.lane.b32.xlu0 %v146, 96
  %v184 = vpop.permute.xlu0 %183
  %185 = vrot.lane.b32.xlu0 %v151, 96
  %v186 = vpop.permute.xlu0 %185
  %187 = vrot.lane.b32.xlu0 %v154, 96
  %v188 = vpop.permute.xlu0 %187
  %189 = vrot.lane.b32.xlu0 %v159, 96
  %v190 = vpop.permute.xlu0 %189
  %191 = vrot.lane.b32.xlu0 %v162, 96
  %v192 = vpop.permute.xlu0 %191
  %193 = vrot.lane.b32.xlu0 %v167, 96
  %v194 = vpop.permute.xlu0 %193
  %195 = vrot.lane.b32.xlu0 %v170, 96
  %v196 = vpop.permute.xlu0 %195
  %205 = vxpose.xlu0.b32.start [1/16] %v182, 128
  %206 = vxpose.xlu0.b32.cont [2/16] %v184, 128
  %207 = vxpose.xlu0.b32.cont [3/16] %v186, 128
  %208 = vxpose.xlu0.b32.cont [4/16] %v188, 128
  %209 = vxpose.xlu0.b32.cont [5/16] %v190, 128
  %210 = vxpose.xlu0.b32.cont [6/16] %v192, 128
  %211 = vxpose.xlu0.b32.cont [7/16] %v194, 128
  %212 = vxpose.xlu0.b32.cont [8/16] %v196, 128
  %213 = vxpose.xlu0.b32.cont [9/16] 0.0, 128
  %214 = vxpose.xlu0.b32.cont [10/16] 0.0, 128
  %215 = vxpose.xlu0.b32.cont [11/16] 0.0, 128
  %216 = vxpose.xlu0.b32.cont [12/16] 0.0, 128
  %217 = vxpose.xlu0.b32.cont [13/16] 0.0, 128
  %218 = vxpose.xlu0.b32.cont [14/16] 0.0, 128
  %219 = vxpose.xlu0.b32.cont [15/16] 0.0, 128
  %220 = vxpose.xlu0.b32.end [16/16] 0.0, 128
  %v221 = vpop.trf.xlu0
  %v222 = vpop.trf.xlu0
  %v223 = vpop.trf.xlu0
  %v224 = vpop.trf.xlu0
  %v225 = vpop.trf.xlu0
  %v226 = vpop.trf.xlu0
  %v227 = vpop.trf.xlu0
  %v228 = vpop.trf.xlu0
  %v229 = vpop.trf.xlu0
  %v230 = vpop.trf.xlu0
  %v231 = vpop.trf.xlu0
  %v232 = vpop.trf.xlu0
  %v233 = vpop.trf.xlu0
  %v234 = vpop.trf.xlu0
  %v235 = vpop.trf.xlu0
  %v236 = vpop.trf.xlu0
  %237 = vset.pattern.permute.xlu0 33
  %238 = vperm.xlu0 %237, %v143
  %v239 = vpop.permute.xlu0 %238
  %241 = vset.pattern.permute.xlu0 33
  %242 = vperm.xlu0 %241, %v146
  %v243 = vpop.permute.xlu0 %242
  %245 = vset.pattern.permute.xlu0 33
  %246 = vperm.xlu0 %245, %v151
  %v247 = vpop.permute.xlu0 %246
  %249 = vset.pattern.permute.xlu0 33
  %250 = vperm.xlu0 %249, %v154
  %v251 = vpop.permute.xlu0 %250
  %253 = vset.pattern.permute.xlu0 33
  %254 = vperm.xlu0 %253, %v159
  %v255 = vpop.permute.xlu0 %254
  %257 = vset.pattern.permute.xlu0 33
  %258 = vperm.xlu0 %257, %v162
  %v259 = vpop.permute.xlu0 %258
  %261 = vset.pattern.permute.xlu0 33
  %262 = vperm.xlu0 %261, %v167
  %v263 = vpop.permute.xlu0 %262
  %265 = vset.pattern.permute.xlu0 33
  %266 = vperm.xlu0 %265, %v170
  %v267 = vpop.permute.xlu0 %266
  %v269 = vlaneseq
  %v270 = vshrl.u32 %v269, 7
  %v271 = vsub.s32 0, %v270
  %v272 = vrot.slane %v221, %v271
  %v273 = vadd.f32 %v239, %v272
  %v274 = vadd.f32 %v243, %v272
  %v275 = vadd.f32 %v247, %v272
  %v276 = vadd.f32 %v251, %v272
  %v277 = vadd.f32 %v255, %v272
  %v278 = vadd.f32 %v259, %v272
  %v279 = vadd.f32 %v263, %v272
  %v280 = vadd.f32 %v267, %v272
  %vm281 = vcmp.gt.f32.partialorder %v273, 0.0
  %vm282 = vcmp.gt.f32.partialorder %v274, 0.0
  %vm283 = vcmp.gt.f32.partialorder %v275, 0.0
  %vm284 = vcmp.gt.f32.partialorder %v276, 0.0
  %vm285 = vcmp.gt.f32.partialorder %v277, 0.0
  %vm286 = vcmp.gt.f32.partialorder %v278, 0.0
  %vm287 = vcmp.gt.f32.partialorder %v279, 0.0
  %vm288 = vcmp.gt.f32.partialorder %v280, 0.0
  %v289 = vmul.f32 %v273, 0.2
  %v290 = vmul.f32 %v274, 0.2
  %v291 = vmul.f32 %v275, 0.2
  %v292 = vmul.f32 %v276, 0.2
  %v293 = vmul.f32 %v277, 0.2
  %v294 = vmul.f32 %v278, 0.2
  %v295 = vmul.f32 %v279, 0.2
  %v296 = vmul.f32 %v280, 0.2
  %v297 = vsel %vm281, %v273, %v289
  %v298 = vsel %vm282, %v274, %v290
  %v299 = vsel %vm283, %v275, %v291
  %v300 = vsel %vm284, %v276, %v292
  %v301 = vsel %vm285, %v277, %v293
  %v302 = vsel %vm286, %v278, %v294
  %v303 = vsel %vm287, %v279, %v295
  %v304 = vsel %vm288, %v280, %v296
  %v305 = vadd.f32 %v297, %v39
  %v306 = vadd.f32 %v298, %v40
  %v307 = vadd.f32 %v299, %v41
  %v308 = vadd.f32 %v300, %v42
  %v309 = vadd.f32 %v301, %v43
  %v310 = vadd.f32 %v302, %v44
  %v311 = vadd.f32 %v303, %v45
  %v312 = vadd.f32 %v304, %v46
  %v313 = vsel %vm47, %v305, -inf
  %314 = vmax.xlane.f32.xlu0 %v313
  %v315 = vpop.xlane.xlu0 %314
  %v316 = vsel %vm47, %v306, -inf
  %317 = vmax.xlane.f32.xlu0 %v316
  %v318 = vpop.xlane.xlu0 %317
  %v319 = vsel %vm47, %v307, -inf
  %320 = vmax.xlane.f32.xlu0 %v319
  %v321 = vpop.xlane.xlu0 %320
  %v322 = vsel %vm47, %v308, -inf
  %323 = vmax.xlane.f32.xlu0 %v322
  %v324 = vpop.xlane.xlu0 %323
  %v325 = vsel %vm47, %v309, -inf
  %326 = vmax.xlane.f32.xlu0 %v325
  %v327 = vpop.xlane.xlu0 %326
  %v328 = vsel %vm47, %v310, -inf
  %329 = vmax.xlane.f32.xlu0 %v328
  %v330 = vpop.xlane.xlu0 %329
  %v331 = vsel %vm47, %v311, -inf
  %332 = vmax.xlane.f32.xlu0 %v331
  %v333 = vpop.xlane.xlu0 %332
  %v334 = vsel %vm47, %v312, -inf
  %335 = vmax.xlane.f32.xlu0 %v334
  %v336 = vpop.xlane.xlu0 %335
  %v337 = vsub.f32 %v305, %v315
  %v338 = vsub.f32 %v306, %v318
  %v339 = vsub.f32 %v307, %v321
  %v340 = vsub.f32 %v308, %v324
  %v341 = vsub.f32 %v309, %v327
  %v342 = vsub.f32 %v310, %v330
  %v343 = vsub.f32 %v311, %v333
  %v344 = vsub.f32 %v312, %v336
  %v345 = vmul.f32 %v337, 1.442695
  %v346 = vpow.pop %v345
  %v347 = vmul.f32 %v338, 1.442695
  %v348 = vpow.pop %v347
  %v349 = vmul.f32 %v339, 1.442695
  %v350 = vpow.pop %v349
  %v351 = vmul.f32 %v340, 1.442695
  %v352 = vpow.pop %v351
  %v353 = vmul.f32 %v341, 1.442695
  %v354 = vpow.pop %v353
  %v355 = vmul.f32 %v342, 1.442695
  %v356 = vpow.pop %v355
  %v357 = vmul.f32 %v343, 1.442695
  %v358 = vpow.pop %v357
  %v359 = vmul.f32 %v344, 1.442695
  %v360 = vpow.pop %v359
  %v361 = vsel %vm47, %v346, 0.0
  %362 = vadd.xlane.f32.xlu0 %v361
  %v363 = vpop.xlane.xlu0 %362
  %v364 = vsel %vm47, %v348, 0.0
  %365 = vadd.xlane.f32.xlu0 %v364
  %v366 = vpop.xlane.xlu0 %365
  %v367 = vsel %vm47, %v350, 0.0
  %368 = vadd.xlane.f32.xlu0 %v367
  %v369 = vpop.xlane.xlu0 %368
  %v370 = vsel %vm47, %v352, 0.0
  %371 = vadd.xlane.f32.xlu0 %v370
  %v372 = vpop.xlane.xlu0 %371
  %v373 = vsel %vm47, %v354, 0.0
  %374 = vadd.xlane.f32.xlu0 %v373
  %v375 = vpop.xlane.xlu0 %374
  %v376 = vsel %vm47, %v356, 0.0
  %377 = vadd.xlane.f32.xlu0 %v376
  %v378 = vpop.xlane.xlu0 %377
  %v379 = vsel %vm47, %v358, 0.0
  %380 = vadd.xlane.f32.xlu0 %v379
  %v381 = vpop.xlane.xlu0 %380
  %v382 = vsel %vm47, %v360, 0.0
  %383 = vadd.xlane.f32.xlu0 %v382
  %v384 = vpop.xlane.xlu0 %383
  %v385 = vmul.f32 %v363, %v50
  %v386 = vmul.f32 %v366, %v53
  %v387 = vmul.f32 %v369, %v56
  %v388 = vmul.f32 %v372, %v59
  %v389 = vmul.f32 %v375, %v62
  %v390 = vmul.f32 %v378, %v65
  %v391 = vmul.f32 %v381, %v68
  %v392 = vmul.f32 %v384, %v71
  %v393 = vrcp.pop %v385
  %v394 = vrcp.pop %v386
  %v395 = vrcp.pop %v387
  %v396 = vrcp.pop %v388
  %v397 = vrcp.pop %v389
  %v398 = vrcp.pop %v390
  %v399 = vrcp.pop %v391
  %v400 = vrcp.pop %v392
  %v401 = vpack.c.bf16 %v348, %v346
  %v402 = vpack.c.bf16 %v352, %v350
  %v403 = vpack.c.bf16 %v356, %v354
  %v404 = vpack.c.bf16 %v360, %v358
  %v405 = vpack.c.bf16 %v146, %v143
  %v406 = vpack.c.bf16 %v154, %v151
  %v407 = vpack.c.bf16 %v162, %v159
  %v408 = vpack.c.bf16 %v170, %v167
  %v410 = vsel %vm47, %v401, 0
  %v413 = vsel %vm47, %v402, 0
  %v416 = vsel %vm47, %v403, 0
  %v419 = vsel %vm47, %v404, 0
  %421 = vmatprep.subr.bf16.mxu0 0
  %422 = vmatpush1.bf16.msra.mxu0 0
  %423 = vmatprep.subr.bf16.mxu0 0
  %424 = vmatpush1.bf16.msra.mxu0 0
  %425 = vmatprep.subr.bf16.mxu0 0
  %426 = vmatpush1.bf16.msra.mxu0 0
  %427 = vmatprep.subr.bf16.mxu0 0
  %428 = vmatpush1.bf16.msra.mxu0 0
  %429 = vmatprep.subr.bf16.mxu0 0
  %430 = vmatpush1.bf16.msra.mxu0 %v408
  %431 = vmatprep.subr.bf16.mxu0 0
  %432 = vmatpush1.bf16.msra.mxu0 %v407
  %433 = vmatprep.subr.bf16.mxu0 0
  %434 = vmatpush1.bf16.msra.mxu0 %v406
  %435 = vmatprep.subr.bf16.mxu0 0
  %436 = vmatpush1.bf16.msra.mxu0 %v405
  %437 = vmatprep.subr.bf16.mxu0 0
  %438 = vmatpush2.bf16.msra.mxu0 0
  %439 = vmatprep.subr.bf16.mxu0 0
  %440 = vmatpush2.bf16.msra.mxu0 0
  %441 = vmatprep.subr.bf16.mxu0 0
  %442 = vmatpush2.bf16.msra.mxu0 0
  %443 = vmatprep.subr.bf16.mxu0 0
  %444 = vmatpush2.bf16.msra.mxu0 0
  %445 = vmatprep.subr.bf16.mxu0 0
  %446 = vmatpush2.bf16.msra.mxu0 0
  %447 = vmatprep.subr.bf16.mxu0 0
  %448 = vmatpush2.bf16.msra.mxu0 0
  %449 = vmatprep.subr.bf16.mxu0 0
  %450 = vmatpush2.bf16.msra.mxu0 0
  %451 = vmatprep.subr.bf16.mxu0 0
  %452 = vmatpush2.bf16.msra.mxu0 0
  %453 = vmatprep.mubr.bf16.mxu0 0
  %454 = vmatmul.mubr.bf16.gmra.mxu0 %v410
  %v455 = vpop.f32.mrf.mxu0
  %v456 = vadd.f32 0.0, %v455
  %v457 = vpop.f32.mrf.mxu0
  %v458 = vpop.f32.mrf.mxu0
  %v459 = vadd.f32 0.0, %v458
  %v460 = vpop.f32.mrf.mxu0
  %461 = vmatprep.mubr.bf16.mxu0 0
  %462 = vmatmul.mubr.bf16.gmra.mxu0 %v413
  %v463 = vpop.f32.mrf.mxu0
  %v464 = vadd.f32 0.0, %v463
  %v465 = vpop.f32.mrf.mxu0
  %v466 = vpop.f32.mrf.mxu0
  %v467 = vadd.f32 0.0, %v466
  %v468 = vpop.f32.mrf.mxu0
  %469 = vmatprep.mubr.bf16.mxu0 0
  %470 = vmatmul.mubr.bf16.gmra.mxu0 %v416
  %v471 = vpop.f32.mrf.mxu0
  %v472 = vadd.f32 0.0, %v471
  %v473 = vpop.f32.mrf.mxu0
  %v474 = vpop.f32.mrf.mxu0
  %v475 = vadd.f32 0.0, %v474
  %v476 = vpop.f32.mrf.mxu0
  %477 = vmatprep.mubr.bf16.mxu0 0
  %478 = vmatmul.mubr.bf16.gmra.mxu0 %v419
  %v479 = vpop.f32.mrf.mxu0
  %v480 = vadd.f32 0.0, %v479
  %v481 = vpop.f32.mrf.mxu0
  %v482 = vpop.f32.mrf.mxu0
  %v483 = vadd.f32 0.0, %v482
  %v484 = vpop.f32.mrf.mxu0
  %485 = vdwg.mxu0
  %v486 = vmul.f32 %v456, %v393
  %v487 = vmul.f32 %v459, %v394
  %v488 = vmul.f32 %v464, %v395
  %v489 = vmul.f32 %v467, %v396
  %v490 = vmul.f32 %v472, %v397
  %v491 = vmul.f32 %v475, %v398
  %v492 = vmul.f32 %v480, %v399
  %v493 = vmul.f32 %v483, %v400
  %v494 = vlaneseq
  %v495 = vshrl.u32 %v494, 7
  %v496 = vsub.s32 0, %v495
  %v497 = vrot.slane %v81, %v496
  %v498 = vmul.f32 %v486, %v497
  %v499 = vmul.f32 %v487, %v497
  %v500 = vmul.f32 %v488, %v497
  %v501 = vmul.f32 %v489, %v497
  %v502 = vmul.f32 %v490, %v497
  %v503 = vmul.f32 %v491, %v497
  %v504 = vmul.f32 %v492, %v497
  %v505 = vmul.f32 %v493, %v497
  %v506 = vlaneseq
  %v507 = vshrl.u32 %v506, 7
  %v508 = vsub.s32 0, %v507
  %v509 = vrot.slane %v82, %v508
  %v510 = vadd.f32 %v498, %v509
  %v511 = vadd.f32 %v499, %v509
  %v512 = vadd.f32 %v500, %v509
  %v513 = vadd.f32 %v501, %v509
  %v514 = vadd.f32 %v502, %v509
  %v515 = vadd.f32 %v503, %v509
  %v516 = vadd.f32 %v504, %v509
  %v517 = vadd.f32 %v505, %v509
  %v518 = vmax.f32 %v510, 0.0
  %v519 = vmax.f32 %v511, 0.0
  %v520 = vmax.f32 %v512, 0.0
  %v521 = vmax.f32 %v513, 0.0
  %v522 = vmax.f32 %v514, 0.0
  %v523 = vmax.f32 %v515, 0.0
  %v524 = vmax.f32 %v516, 0.0
  %v525 = vmax.f32 %v517, 0.0
  %v526 = vpack.c.bf16 %v519, %v518
  %v527 = vpack.c.bf16 %v521, %v520
  %v528 = vpack.c.bf16 %v523, %v522
  %v529 = vpack.c.bf16 %v525, %v524
  %v530 = vpack.c.bf16 %v74, %v73
  %v531 = vpack.c.bf16 %v76, %v75
  %vm532 = vcmask 261120
  %v534 = vsel %vm532, %v526, 0
  %v537 = vsel %vm532, %v527, 0
  %v540 = vsel %vm532, %v528, 0
  %v543 = vsel %vm532, %v529, 0
  %545 = vmatprep.subr.bf16.mxu0 0
  %546 = vmatpush1.bf16.msra.mxu0 0
  %547 = vmatprep.subr.bf16.mxu0 0
  %548 = vmatpush1.bf16.msra.mxu0 0
  %549 = vmatprep.subr.bf16.mxu0 0
  %550 = vmatpush1.bf16.msra.mxu0 0
  %551 = vmatprep.subr.bf16.mxu0 0
  %552 = vmatpush1.bf16.msra.mxu0 0
  %553 = vmatprep.subr.bf16.mxu0 0
  %554 = vmatpush1.bf16.msra.mxu0 0
  %555 = vmatprep.subr.bf16.mxu0 0
  %556 = vmatpush1.bf16.msra.mxu0 0
  %557 = vmatprep.subr.bf16.mxu0 0
  %558 = vmatpush1.bf16.msra.mxu0 %v531
  %559 = vmatprep.subr.bf16.mxu0 0
  %560 = vmatpush1.bf16.msra.mxu0 %v530
  %561 = vmatprep.subr.bf16.mxu0 0
  %562 = vmatpush2.bf16.msra.mxu0 0
  %563 = vmatprep.subr.bf16.mxu0 0
  %564 = vmatpush2.bf16.msra.mxu0 0
  %565 = vmatprep.subr.bf16.mxu0 0
  %566 = vmatpush2.bf16.msra.mxu0 0
  %567 = vmatprep.subr.bf16.mxu0 0
  %568 = vmatpush2.bf16.msra.mxu0 0
  %569 = vmatprep.subr.bf16.mxu0 0
  %570 = vmatpush2.bf16.msra.mxu0 0
  %571 = vmatprep.subr.bf16.mxu0 0
  %572 = vmatpush2.bf16.msra.mxu0 0
  %573 = vmatprep.subr.bf16.mxu0 0
  %574 = vmatpush2.bf16.msra.mxu0 0
  %575 = vmatprep.subr.bf16.mxu0 0
  %576 = vmatpush2.bf16.msra.mxu0 0
  %577 = vmatprep.mubr.bf16.mxu0 0
  %578 = vmatmul.mubr.bf16.gmra.mxu0 %v534
  %v579 = vpop.f32.mrf.mxu0
  %v580 = vadd.f32 0.0, %v579
  %v581 = vpop.f32.mrf.mxu0
  %v582 = vpop.f32.mrf.mxu0
  %v583 = vadd.f32 0.0, %v582
  %v584 = vpop.f32.mrf.mxu0
  %585 = vmatprep.mubr.bf16.mxu0 0
  %586 = vmatmul.mubr.bf16.gmra.mxu0 %v537
  %v587 = vpop.f32.mrf.mxu0
  %v588 = vadd.f32 0.0, %v587
  %v589 = vpop.f32.mrf.mxu0
  %v590 = vpop.f32.mrf.mxu0
  %v591 = vadd.f32 0.0, %v590
  %v592 = vpop.f32.mrf.mxu0
  %593 = vmatprep.mubr.bf16.mxu0 0
  %594 = vmatmul.mubr.bf16.gmra.mxu0 %v540
  %v595 = vpop.f32.mrf.mxu0
  %v596 = vadd.f32 0.0, %v595
  %v597 = vpop.f32.mrf.mxu0
  %v598 = vpop.f32.mrf.mxu0
  %v599 = vadd.f32 0.0, %v598
  %v600 = vpop.f32.mrf.mxu0
  %601 = vmatprep.mubr.bf16.mxu0 0
  %602 = vmatmul.mubr.bf16.gmra.mxu0 %v543
  %v603 = vpop.f32.mrf.mxu0
  %v604 = vadd.f32 0.0, %v603
  %v605 = vpop.f32.mrf.mxu0
  %v606 = vpop.f32.mrf.mxu0
  %v607 = vadd.f32 0.0, %v606
  %v608 = vpop.f32.mrf.mxu0
  %609 = vdwg.mxu0
  %618 = vrot.lane.b32.xlu0 %v580, 96
  %v619 = vpop.permute.xlu0 %618
  %620 = vrot.lane.b32.xlu0 %v583, 96
  %v621 = vpop.permute.xlu0 %620
  %622 = vrot.lane.b32.xlu0 %v588, 96
  %v623 = vpop.permute.xlu0 %622
  %624 = vrot.lane.b32.xlu0 %v591, 96
  %v625 = vpop.permute.xlu0 %624
  %626 = vrot.lane.b32.xlu0 %v596, 96
  %v627 = vpop.permute.xlu0 %626
  %628 = vrot.lane.b32.xlu0 %v599, 96
  %v629 = vpop.permute.xlu0 %628
  %630 = vrot.lane.b32.xlu0 %v604, 96
  %v631 = vpop.permute.xlu0 %630
  %632 = vrot.lane.b32.xlu0 %v607, 96
  %v633 = vpop.permute.xlu0 %632
  %642 = vxpose.xlu0.b32.start [1/16] %v619, 128
  %643 = vxpose.xlu0.b32.cont [2/16] %v621, 128
  %644 = vxpose.xlu0.b32.cont [3/16] %v623, 128
  %645 = vxpose.xlu0.b32.cont [4/16] %v625, 128
  %646 = vxpose.xlu0.b32.cont [5/16] %v627, 128
  %647 = vxpose.xlu0.b32.cont [6/16] %v629, 128
  %648 = vxpose.xlu0.b32.cont [7/16] %v631, 128
  %649 = vxpose.xlu0.b32.cont [8/16] %v633, 128
  %650 = vxpose.xlu0.b32.cont [9/16] 0.0, 128
  %651 = vxpose.xlu0.b32.cont [10/16] 0.0, 128
  %652 = vxpose.xlu0.b32.cont [11/16] 0.0, 128
  %653 = vxpose.xlu0.b32.cont [12/16] 0.0, 128
  %654 = vxpose.xlu0.b32.cont [13/16] 0.0, 128
  %655 = vxpose.xlu0.b32.cont [14/16] 0.0, 128
  %656 = vxpose.xlu0.b32.cont [15/16] 0.0, 128
  %657 = vxpose.xlu0.b32.end [16/16] 0.0, 128
  %v658 = vpop.trf.xlu0
  %v659 = vpop.trf.xlu0
  %v660 = vpop.trf.xlu0
  %v661 = vpop.trf.xlu0
  %v662 = vpop.trf.xlu0
  %v663 = vpop.trf.xlu0
  %v664 = vpop.trf.xlu0
  %v665 = vpop.trf.xlu0
  %v666 = vpop.trf.xlu0
  %v667 = vpop.trf.xlu0
  %v668 = vpop.trf.xlu0
  %v669 = vpop.trf.xlu0
  %v670 = vpop.trf.xlu0
  %v671 = vpop.trf.xlu0
  %v672 = vpop.trf.xlu0
  %v673 = vpop.trf.xlu0
  %674 = vset.pattern.permute.xlu0 33
  %675 = vperm.xlu0 %674, %v580
  %v676 = vpop.permute.xlu0 %675
  %678 = vset.pattern.permute.xlu0 33
  %679 = vperm.xlu0 %678, %v583
  %v680 = vpop.permute.xlu0 %679
  %682 = vset.pattern.permute.xlu0 33
  %683 = vperm.xlu0 %682, %v588
  %v684 = vpop.permute.xlu0 %683
  %686 = vset.pattern.permute.xlu0 33
  %687 = vperm.xlu0 %686, %v591
  %v688 = vpop.permute.xlu0 %687
  %690 = vset.pattern.permute.xlu0 33
  %691 = vperm.xlu0 %690, %v596
  %v692 = vpop.permute.xlu0 %691
  %694 = vset.pattern.permute.xlu0 33
  %695 = vperm.xlu0 %694, %v599
  %v696 = vpop.permute.xlu0 %695
  %698 = vset.pattern.permute.xlu0 33
  %699 = vperm.xlu0 %698, %v604
  %v700 = vpop.permute.xlu0 %699
  %702 = vset.pattern.permute.xlu0 33
  %703 = vperm.xlu0 %702, %v607
  %v704 = vpop.permute.xlu0 %703
  %v706 = vlaneseq
  %v707 = vshrl.u32 %v706, 7
  %v708 = vsub.s32 0, %v707
  %v709 = vrot.slane %v658, %v708
  %v710 = vadd.f32 %v676, %v709
  %v711 = vadd.f32 %v680, %v709
  %v712 = vadd.f32 %v684, %v709
  %v713 = vadd.f32 %v688, %v709
  %v714 = vadd.f32 %v692, %v709
  %v715 = vadd.f32 %v696, %v709
  %v716 = vadd.f32 %v700, %v709
  %v717 = vadd.f32 %v704, %v709
  %vm718 = vcmp.gt.f32.partialorder %v710, 0.0
  %vm719 = vcmp.gt.f32.partialorder %v711, 0.0
  %vm720 = vcmp.gt.f32.partialorder %v712, 0.0
  %vm721 = vcmp.gt.f32.partialorder %v713, 0.0
  %vm722 = vcmp.gt.f32.partialorder %v714, 0.0
  %vm723 = vcmp.gt.f32.partialorder %v715, 0.0
  %vm724 = vcmp.gt.f32.partialorder %v716, 0.0
  %vm725 = vcmp.gt.f32.partialorder %v717, 0.0
  %v726 = vmul.f32 %v710, 0.2
  %v727 = vmul.f32 %v711, 0.2
  %v728 = vmul.f32 %v712, 0.2
  %v729 = vmul.f32 %v713, 0.2
  %v730 = vmul.f32 %v714, 0.2
  %v731 = vmul.f32 %v715, 0.2
  %v732 = vmul.f32 %v716, 0.2
  %v733 = vmul.f32 %v717, 0.2
  %v734 = vsel %vm718, %v710, %v726
  %v735 = vsel %vm719, %v711, %v727
  %v736 = vsel %vm720, %v712, %v728
  %v737 = vsel %vm721, %v713, %v729
  %v738 = vsel %vm722, %v714, %v730
  %v739 = vsel %vm723, %v715, %v731
  %v740 = vsel %vm724, %v716, %v732
  %v741 = vsel %vm725, %v717, %v733
  %v742 = vadd.f32 %v734, %v39
  %v743 = vadd.f32 %v735, %v40
  %v744 = vadd.f32 %v736, %v41
  %v745 = vadd.f32 %v737, %v42
  %v746 = vadd.f32 %v738, %v43
  %v747 = vadd.f32 %v739, %v44
  %v748 = vadd.f32 %v740, %v45
  %v749 = vadd.f32 %v741, %v46
  %v750 = vsel %vm47, %v742, -inf
  %751 = vmax.xlane.f32.xlu0 %v750
  %v752 = vpop.xlane.xlu0 %751
  %v753 = vsel %vm47, %v743, -inf
  %754 = vmax.xlane.f32.xlu0 %v753
  %v755 = vpop.xlane.xlu0 %754
  %v756 = vsel %vm47, %v744, -inf
  %757 = vmax.xlane.f32.xlu0 %v756
  %v758 = vpop.xlane.xlu0 %757
  %v759 = vsel %vm47, %v745, -inf
  %760 = vmax.xlane.f32.xlu0 %v759
  %v761 = vpop.xlane.xlu0 %760
  %v762 = vsel %vm47, %v746, -inf
  %763 = vmax.xlane.f32.xlu0 %v762
  %v764 = vpop.xlane.xlu0 %763
  %v765 = vsel %vm47, %v747, -inf
  %766 = vmax.xlane.f32.xlu0 %v765
  %v767 = vpop.xlane.xlu0 %766
  %v768 = vsel %vm47, %v748, -inf
  %769 = vmax.xlane.f32.xlu0 %v768
  %v770 = vpop.xlane.xlu0 %769
  %v771 = vsel %vm47, %v749, -inf
  %772 = vmax.xlane.f32.xlu0 %v771
  %v773 = vpop.xlane.xlu0 %772
  %v774 = vsub.f32 %v742, %v752
  %v775 = vsub.f32 %v743, %v755
  %v776 = vsub.f32 %v744, %v758
  %v777 = vsub.f32 %v745, %v761
  %v778 = vsub.f32 %v746, %v764
  %v779 = vsub.f32 %v747, %v767
  %v780 = vsub.f32 %v748, %v770
  %v781 = vsub.f32 %v749, %v773
  %v782 = vmul.f32 %v774, 1.442695
  %v783 = vpow.pop %v782
  %v784 = vmul.f32 %v775, 1.442695
  %v785 = vpow.pop %v784
  %v786 = vmul.f32 %v776, 1.442695
  %v787 = vpow.pop %v786
  %v788 = vmul.f32 %v777, 1.442695
  %v789 = vpow.pop %v788
  %v790 = vmul.f32 %v778, 1.442695
  %v791 = vpow.pop %v790
  %v792 = vmul.f32 %v779, 1.442695
  %v793 = vpow.pop %v792
  %v794 = vmul.f32 %v780, 1.442695
  %v795 = vpow.pop %v794
  %v796 = vmul.f32 %v781, 1.442695
  %v797 = vpow.pop %v796
  %v798 = vsel %vm47, %v783, 0.0
  %799 = vadd.xlane.f32.xlu0 %v798
  %v800 = vpop.xlane.xlu0 %799
  %v801 = vsel %vm47, %v785, 0.0
  %802 = vadd.xlane.f32.xlu0 %v801
  %v803 = vpop.xlane.xlu0 %802
  %v804 = vsel %vm47, %v787, 0.0
  %805 = vadd.xlane.f32.xlu0 %v804
  %v806 = vpop.xlane.xlu0 %805
  %v807 = vsel %vm47, %v789, 0.0
  %808 = vadd.xlane.f32.xlu0 %v807
  %v809 = vpop.xlane.xlu0 %808
  %v810 = vsel %vm47, %v791, 0.0
  %811 = vadd.xlane.f32.xlu0 %v810
  %v812 = vpop.xlane.xlu0 %811
  %v813 = vsel %vm47, %v793, 0.0
  %814 = vadd.xlane.f32.xlu0 %v813
  %v815 = vpop.xlane.xlu0 %814
  %v816 = vsel %vm47, %v795, 0.0
  %817 = vadd.xlane.f32.xlu0 %v816
  %v818 = vpop.xlane.xlu0 %817
  %v819 = vsel %vm47, %v797, 0.0
  %820 = vadd.xlane.f32.xlu0 %v819
  %v821 = vpop.xlane.xlu0 %820
  %v822 = vmul.f32 %v800, %v50
  %v823 = vmul.f32 %v803, %v53
  %v824 = vmul.f32 %v806, %v56
  %v825 = vmul.f32 %v809, %v59
  %v826 = vmul.f32 %v812, %v62
  %v827 = vmul.f32 %v815, %v65
  %v828 = vmul.f32 %v818, %v68
  %v829 = vmul.f32 %v821, %v71
  %v830 = vrcp.pop %v822
  %v831 = vrcp.pop %v823
  %v832 = vrcp.pop %v824
  %v833 = vrcp.pop %v825
  %v834 = vrcp.pop %v826
  %v835 = vrcp.pop %v827
  %v836 = vrcp.pop %v828
  %v837 = vrcp.pop %v829
  %v838 = vpack.c.bf16 %v785, %v783
  %v839 = vpack.c.bf16 %v789, %v787
  %v840 = vpack.c.bf16 %v793, %v791
  %v841 = vpack.c.bf16 %v797, %v795
  %v842 = vpack.c.bf16 %v583, %v580
  %v843 = vpack.c.bf16 %v591, %v588
  %v844 = vpack.c.bf16 %v599, %v596
  %v845 = vpack.c.bf16 %v607, %v604
  %v847 = vsel %vm47, %v838, 0
  %v850 = vsel %vm47, %v839, 0
  %v853 = vsel %vm47, %v840, 0
  %v856 = vsel %vm47, %v841, 0
  %858 = vmatprep.subr.bf16.mxu0 0
  %859 = vmatpush1.bf16.msra.mxu0 0
  %860 = vmatprep.subr.bf16.mxu0 0
  %861 = vmatpush1.bf16.msra.mxu0 0
  %862 = vmatprep.subr.bf16.mxu0 0
  %863 = vmatpush1.bf16.msra.mxu0 0
  %864 = vmatprep.subr.bf16.mxu0 0
  %865 = vmatpush1.bf16.msra.mxu0 0
  %866 = vmatprep.subr.bf16.mxu0 0
  %867 = vmatpush1.bf16.msra.mxu0 %v845
  %868 = vmatprep.subr.bf16.mxu0 0
  %869 = vmatpush1.bf16.msra.mxu0 %v844
  %870 = vmatprep.subr.bf16.mxu0 0
  %871 = vmatpush1.bf16.msra.mxu0 %v843
  %872 = vmatprep.subr.bf16.mxu0 0
  %873 = vmatpush1.bf16.msra.mxu0 %v842
  %874 = vmatprep.subr.bf16.mxu0 0
  %875 = vmatpush2.bf16.msra.mxu0 0
  %876 = vmatprep.subr.bf16.mxu0 0
  %877 = vmatpush2.bf16.msra.mxu0 0
  %878 = vmatprep.subr.bf16.mxu0 0
  %879 = vmatpush2.bf16.msra.mxu0 0
  %880 = vmatprep.subr.bf16.mxu0 0
  %881 = vmatpush2.bf16.msra.mxu0 0
  %882 = vmatprep.subr.bf16.mxu0 0
  %883 = vmatpush2.bf16.msra.mxu0 0
  %884 = vmatprep.subr.bf16.mxu0 0
  %885 = vmatpush2.bf16.msra.mxu0 0
  %886 = vmatprep.subr.bf16.mxu0 0
  %887 = vmatpush2.bf16.msra.mxu0 0
  %888 = vmatprep.subr.bf16.mxu0 0
  %889 = vmatpush2.bf16.msra.mxu0 0
  %890 = vmatprep.mubr.bf16.mxu0 0
  %891 = vmatmul.mubr.bf16.gmra.mxu0 %v847
  %v892 = vpop.f32.mrf.mxu0
  %v893 = vadd.f32 0.0, %v892
  %v894 = vpop.f32.mrf.mxu0
  %v895 = vpop.f32.mrf.mxu0
  %v896 = vadd.f32 0.0, %v895
  %v897 = vpop.f32.mrf.mxu0
  %898 = vmatprep.mubr.bf16.mxu0 0
  %899 = vmatmul.mubr.bf16.gmra.mxu0 %v850
  %v900 = vpop.f32.mrf.mxu0
  %v901 = vadd.f32 0.0, %v900
  %v902 = vpop.f32.mrf.mxu0
  %v903 = vpop.f32.mrf.mxu0
  %v904 = vadd.f32 0.0, %v903
  %v905 = vpop.f32.mrf.mxu0
  %906 = vmatprep.mubr.bf16.mxu0 0
  %907 = vmatmul.mubr.bf16.gmra.mxu0 %v853
  %v908 = vpop.f32.mrf.mxu0
  %v909 = vadd.f32 0.0, %v908
  %v910 = vpop.f32.mrf.mxu0
  %v911 = vpop.f32.mrf.mxu0
  %v912 = vadd.f32 0.0, %v911
  %v913 = vpop.f32.mrf.mxu0
  %914 = vmatprep.mubr.bf16.mxu0 0
  %915 = vmatmul.mubr.bf16.gmra.mxu0 %v856
  %v916 = vpop.f32.mrf.mxu0
  %v917 = vadd.f32 0.0, %v916
  %v918 = vpop.f32.mrf.mxu0
  %v919 = vpop.f32.mrf.mxu0
  %v920 = vadd.f32 0.0, %v919
  %v921 = vpop.f32.mrf.mxu0
  %922 = vdwg.mxu0
  %v923 = vmul.f32 %v893, %v830
  %v924 = vmul.f32 %v896, %v831
  %v925 = vmul.f32 %v901, %v832
  %v926 = vmul.f32 %v904, %v833
  %v927 = vmul.f32 %v909, %v834
  %v928 = vmul.f32 %v912, %v835
  %v929 = vmul.f32 %v917, %v836
  %v930 = vmul.f32 %v920, %v837
  %v931 = vlaneseq
  %v932 = vshrl.u32 %v931, 7
  %v933 = vsub.s32 0, %v932
  %v934 = vrot.slane %v83, %v933
  %v935 = vmul.f32 %v923, %v934
  %v936 = vmul.f32 %v924, %v934
  %v937 = vmul.f32 %v925, %v934
  %v938 = vmul.f32 %v926, %v934
  %v939 = vmul.f32 %v927, %v934
  %v940 = vmul.f32 %v928, %v934
  %v941 = vmul.f32 %v929, %v934
  %v942 = vmul.f32 %v930, %v934
  %v943 = vlaneseq
  %v944 = vshrl.u32 %v943, 7
  %v945 = vsub.s32 0, %v944
  %v946 = vrot.slane %v84, %v945
  %v947 = vadd.f32 %v935, %v946
  %v948 = vadd.f32 %v936, %v946
  %v949 = vadd.f32 %v937, %v946
  %v950 = vadd.f32 %v938, %v946
  %v951 = vadd.f32 %v939, %v946
  %v952 = vadd.f32 %v940, %v946
  %v953 = vadd.f32 %v941, %v946
  %v954 = vadd.f32 %v942, %v946
  %v955 = vmax.f32 %v947, 0.0
  %v956 = vmax.f32 %v948, 0.0
  %v957 = vmax.f32 %v949, 0.0
  %v958 = vmax.f32 %v950, 0.0
  %v959 = vmax.f32 %v951, 0.0
  %v960 = vmax.f32 %v952, 0.0
  %v961 = vmax.f32 %v953, 0.0
  %v962 = vmax.f32 %v954, 0.0
  %v963 = vpack.c.bf16 %v956, %v955
  %v964 = vpack.c.bf16 %v958, %v957
  %v965 = vpack.c.bf16 %v960, %v959
  %v966 = vpack.c.bf16 %v962, %v961
  %v967 = vpack.c.bf16 %v78, %v77
  %v968 = vpack.c.bf16 %v80, %v79
  %v969 = vlaneseq
  %v970 = vshrl.u32 %v969, 7
  %v971 = vsub.s32 0, %v970
  %v972 = vrot.slane %v85, %v971
  %v974 = vsel %vm532, %v963, 0
  %v977 = vsel %vm532, %v964, 0
  %v980 = vsel %vm532, %v965, 0
  %v983 = vsel %vm532, %v966, 0
  %985 = vmatprep.subr.bf16.mxu0 0
  %986 = vmatpush1.bf16.msra.mxu0 0
  %987 = vmatprep.subr.bf16.mxu0 0
  %988 = vmatpush1.bf16.msra.mxu0 0
  %989 = vmatprep.subr.bf16.mxu0 0
  %990 = vmatpush1.bf16.msra.mxu0 0
  %991 = vmatprep.subr.bf16.mxu0 0
  %992 = vmatpush1.bf16.msra.mxu0 0
  %993 = vmatprep.subr.bf16.mxu0 0
  %994 = vmatpush1.bf16.msra.mxu0 0
  %995 = vmatprep.subr.bf16.mxu0 0
  %996 = vmatpush1.bf16.msra.mxu0 0
  %997 = vmatprep.subr.bf16.mxu0 0
  %998 = vmatpush1.bf16.msra.mxu0 %v968
  %999 = vmatprep.subr.bf16.mxu0 0
  %1000 = vmatpush1.bf16.msra.mxu0 %v967
  %1001 = vmatprep.subr.bf16.mxu0 0
  %1002 = vmatpush2.bf16.msra.mxu0 0
  %1003 = vmatprep.subr.bf16.mxu0 0
  %1004 = vmatpush2.bf16.msra.mxu0 0
  %1005 = vmatprep.subr.bf16.mxu0 0
  %1006 = vmatpush2.bf16.msra.mxu0 0
  %1007 = vmatprep.subr.bf16.mxu0 0
  %1008 = vmatpush2.bf16.msra.mxu0 0
  %1009 = vmatprep.subr.bf16.mxu0 0
  %1010 = vmatpush2.bf16.msra.mxu0 0
  %1011 = vmatprep.subr.bf16.mxu0 0
  %1012 = vmatpush2.bf16.msra.mxu0 0
  %1013 = vmatprep.subr.bf16.mxu0 0
  %1014 = vmatpush2.bf16.msra.mxu0 0
  %1015 = vmatprep.subr.bf16.mxu0 0
  %1016 = vmatpush2.bf16.msra.mxu0 0
  %1017 = vmatprep.mubr.bf16.mxu0 0
  %1018 = vmatmul.mubr.bf16.gmra.mxu0 %v974
  %v1019 = vpop.f32.mrf.mxu0
  %v1020 = vadd.f32 %v972, %v1019
  %v1021 = vpop.f32.mrf.mxu0
  %v1022 = vpop.f32.mrf.mxu0
  %v1023 = vadd.f32 %v972, %v1022
  %v1024 = vpop.f32.mrf.mxu0
  %1025 = vmatprep.mubr.bf16.mxu0 0
  %1026 = vmatmul.mubr.bf16.gmra.mxu0 %v977
  %v1027 = vpop.f32.mrf.mxu0
  %v1028 = vadd.f32 %v972, %v1027
  %v1029 = vpop.f32.mrf.mxu0
  %v1030 = vpop.f32.mrf.mxu0
  %v1031 = vadd.f32 %v972, %v1030
  %v1032 = vpop.f32.mrf.mxu0
  %1033 = vmatprep.mubr.bf16.mxu0 0
  %1034 = vmatmul.mubr.bf16.gmra.mxu0 %v980
  %v1035 = vpop.f32.mrf.mxu0
  %v1036 = vadd.f32 %v972, %v1035
  %v1037 = vpop.f32.mrf.mxu0
  %v1038 = vpop.f32.mrf.mxu0
  %v1039 = vadd.f32 %v972, %v1038
  %v1040 = vpop.f32.mrf.mxu0
  %1041 = vmatprep.mubr.bf16.mxu0 0
  %1042 = vmatmul.mubr.bf16.gmra.mxu0 %v983
  %v1043 = vpop.f32.mrf.mxu0
  %v1044 = vadd.f32 %v972, %v1043
  %v1045 = vpop.f32.mrf.mxu0
  %v1046 = vpop.f32.mrf.mxu0
  %v1047 = vadd.f32 %v972, %v1046
  %v1048 = vpop.f32.mrf.mxu0
  %1049 = vdwg.mxu0
  %v1050 = vmax.f32 %v1020, 0.0
  %v1051 = vmax.f32 %v1023, 0.0
  %v1052 = vmax.f32 %v1028, 0.0
  %v1053 = vmax.f32 %v1031, 0.0
  %v1054 = vmax.f32 %v1036, 0.0
  %v1055 = vmax.f32 %v1039, 0.0
  %v1056 = vmax.f32 %v1044, 0.0
  %v1057 = vmax.f32 %v1047, 0.0
  %1058 = vst.msk [vmem:[%s3] sm:$0xff] %vm532, %v1050
  %1059 = vst.msk [vmem:[%s3 + $0x8] sm:$0xff] %vm532, %v1051
  %1060 = vst.msk [vmem:[%s3 + $0x10] sm:$0xff] %vm532, %v1052
  %1061 = vst.msk [vmem:[%s3 + $0x18] sm:$0xff] %vm532, %v1053
  %1062 = vst.msk [vmem:[%s3 + $0x20] sm:$0xff] %vm532, %v1054
  %1063 = vst.msk [vmem:[%s3 + $0x28] sm:$0xff] %vm532, %v1055
  %1064 = vst.msk [vmem:[%s3 + $0x30] sm:$0xff] %vm532, %v1056
  %1065 = vst.msk [vmem:[%s3 + $0x38] sm:$0xff] %vm532, %v1057
  // Predicated region
  $region14: #{conductivity_gat_forward.1} parent=0 // pred_check
    _
  $region15: #{conductivity_gat_forward.1} parent=0 // pred_check_branch
    %1067 = sbr.rel (0) target = $region17
  $region16: #{conductivity_gat_forward.1} parent=0 // pred_region
    _
  $region17: #{conductivity_gat_forward.1} parent=0 // pred_fallthru
    _
  // Predicated region
  $region18: #{conductivity_gat_forward.1} parent=0 // pred_check
    _
  $region19: #{conductivity_gat_forward.1} parent=0 // pred_check_branch
    %1069 = sbr.rel (0) target = $region21
  $region20: #{conductivity_gat_forward.1} parent=0 // pred_region
    _
  $region21: #{conductivity_gat_forward.1} parent=0 // pred_fallthru
    _

</llo_original>
